<compile_context>
chip_gen: v6e
topology: v6e:2x2x1
jax: 0.10.0
libtpu: 0.0.40
codegen_flags: <defaults>
</compile_context>

<pallas_src>
import functools

import jax
import jax.numpy as jnp
from jax.experimental import pallas as pl
from jax.experimental.pallas import tpu as pltpu


_SUBLANE = {1: 32, 2: 16, 4: 8}   # sublane tile height per itemsize


def _round_up(v, m):
    return ((v + m - 1) // m) * m


def _plan_blocks(B, C, T, x_dtype, mask_dtype, budget_bytes=8 * 1024 * 1024):
    """Pick (batch_block, t_block, nb, nt) from a VMEM byte budget.

    Budget accounts for double-buffering of the x / y / mask streams *including* the
    sublane padding of (BB, C, T_BLK) and (BB, 1, T_BLK) blocks (C and 1 pad up to the
    8 / 16 / 32-row sublane tile).
    """
    isz_x = jnp.dtype(x_dtype).itemsize
    isz_m = jnp.dtype(mask_dtype).itemsize
    sub_x = _SUBLANE.get(isz_x, 8)
    sub_m = _SUBLANE.get(isz_m, 8)
    T128 = _round_up(T, 128)

    per_bt = 2 * (2 * _round_up(C, sub_x) * isz_x    # x + y blocks, double buffered
                  + sub_m * isz_m)                   # mask block (1 -> sublane-tile padded)
    max_bt = max(budget_bytes // per_bt, 256)        # batch-rows * lanes we can afford

    if B <= 8:
        bb = B                                                    # block == full batch dim
    else:
        bb = max((min(max_bt // T128, B) // 8) * 8, 8)            # multiple of 8
    t_lanes = min(T128, max(128, ((max_bt // bb) // 128) * 128))  # multiple of 128

    # v7x: 2 TensorCores share work only via grid sharding -> aim for >= 2 grid steps.
    if pl.cdiv(B, bb) == 1 and pl.cdiv(T128, t_lanes) == 1:
        if B > 8 and bb >= 16:
            bb = _round_up(bb // 2, 8)
        elif T128 >= 256:
            t_lanes = _round_up(T128 // 2, 128)

    nb = pl.cdiv(B, bb)
    nt = pl.cdiv(T128, t_lanes)
    t_blk = T if nt == 1 else t_lanes   # single T block: exact width (no ragged overhang)
    return bb, t_blk, nb, nt


# ----------------------------- kernels ---------------------------------------------

def _affine_fwd_kernel(x_ref, mask_ref, m_ref, scale_ref, ls_ref, y_ref, ld_ref,
                       *, t_total, t_blk, guard):
    x = x_ref[...].astype(jnp.float32)       # (BB, C, T_BLK)  native dtype -> f32 math
    mask = mask_ref[...].astype(jnp.float32)  # (BB, 1, T_BLK)

    if guard:   # last T block overhangs the array: zero the out-of-range mask lanes
        t0 = pl.program_id(1) * t_blk
        lane = jax.lax.broadcasted_iota(jnp.int32, mask.shape, 2)
        mask = jnp.where(t0 + lane < t_total, mask, 0.0)

    m = m_ref[...]          # (C, 1) f32
    scale = scale_ref[...]  # (C, 1) f32 = exp(logs), hoisted to the wrapper

    y = (m[None, :, :] + scale[None, :, :] * x) * mask
    y_ref[...] = y.astype(y_ref.dtype)

    # partial logdet for this (batch block, T block): logs_sum * sum_t mask   (exact)
    mask_sum = jnp.sum(mask[:, 0, :], axis=1, keepdims=True)       # (BB, 1)
    ld_ref[...] = jnp.broadcast_to(ls_ref[0] * mask_sum, ld_ref.shape)


def _affine_rev_kernel(x_ref, mask_ref, m_ref, inv_scale_ref, y_ref):
    x = x_ref[...].astype(jnp.float32)
    mask = mask_ref[...].astype(jnp.float32)
    m = m_ref[...]
    inv = inv_scale_ref[...]   # exp(-logs), hoisted
    y_ref[...] = ((x - m[None, :, :]) * inv[None, :, :] * mask).astype(y_ref.dtype)


# ----------------------------- wrappers --------------------------------------------

def elementwise_affine_forward(x, x_mask, m, logs):
    """x: (B, C, T) NCT (any float dtype); x_mask: (B, 1, T); m/logs: (C, 1).

    Returns (y (B, C, T) in x.dtype, logdet (B,) fp32) — the reverse=False path.
    """
    B, C, T = x.shape
    x_mask = jnp.asarray(x_mask)
    if x_mask.ndim == 2:
        x_mask = x_mask[:, None, :]

    m32 = jnp.asarray(m, jnp.float32).reshape(C, 1)
    logs32 = jnp.asarray(logs, jnp.float32).reshape(C, 1)
    scale = jnp.exp(logs32)                          # (C,1) — hoisted EUP work
    logs_sum = jnp.sum(logs32).reshape(1)            # SMEM scalar

    bb, t_blk, nb, nt = _plan_blocks(B, C, T, x.dtype, x_mask.dtype)
    guard = (nt * t_blk > T)

    kernel = functools.partial(_affine_fwd_kernel, t_total=T, t_blk=t_blk, guard=guard)

    in_specs = [
        pl.BlockSpec((bb, C, t_blk), lambda ib, it: (ib, 0, it)),
        pl.BlockSpec((bb, 1, t_blk), lambda ib, it: (ib, 0, it)),
        pl.BlockSpec((C, 1), lambda ib, it: (0, 0)),
        pl.BlockSpec((C, 1), lambda ib, it: (0, 0)),
        pl.BlockSpec(memory_space=pltpu.MemorySpace.SMEM),
    ]
    out_specs = (
        pl.BlockSpec((bb, C, t_blk), lambda ib, it: (ib, 0, it)),
        pl.BlockSpec((bb, 128), lambda ib, it: (ib, it)),
    )
    out_shape = (
        jax.ShapeDtypeStruct((B, C, T), x.dtype),                 # y in the input dtype
        jax.ShapeDtypeStruct((nb * bb, nt * 128), jnp.float32),   # per-block logdet partials
    )

    y, ld_part = pl.pallas_call(
        kernel,
        out_shape=out_shape,
        grid_spec=pltpu.PrefetchScalarGridSpec(
            num_scalar_prefetch=0,
            grid=(nb, nt),
            in_specs=in_specs,
            out_specs=out_specs,
        ),
        compiler_params=pltpu.CompilerParams(
            dimension_semantics=("parallel", "parallel")),
    )(x, x_mask, m32, scale, logs_sum)

    # finish the logdet: one value per (batch row, T block) lives at lane it*128
    logdet = jnp.sum(ld_part[:B, ::128], axis=1)
    return y, logdet


def elementwise_affine_reverse(x, x_mask, m, logs):
    """reverse=True path: returns (B, C, T) in x.dtype (no logdet), matching the module."""
    B, C, T = x.shape
    x_mask = jnp.asarray(x_mask)
    if x_mask.ndim == 2:
        x_mask = x_mask[:, None, :]

    m32 = jnp.asarray(m, jnp.float32).reshape(C, 1)
    inv_scale = jnp.exp(-jnp.asarray(logs, jnp.float32).reshape(C, 1))

    bb, t_blk, nb, nt = _plan_blocks(B, C, T, x.dtype, x_mask.dtype)

    in_specs = [
        pl.BlockSpec((bb, C, t_blk), lambda ib, it: (ib, 0, it)),
        pl.BlockSpec((bb, 1, t_blk), lambda ib, it: (ib, 0, it)),
        pl.BlockSpec((C, 1), lambda ib, it: (0, 0)),
        pl.BlockSpec((C, 1), lambda ib, it: (0, 0)),
    ]
    out_specs = pl.BlockSpec((bb, C, t_blk), lambda ib, it: (ib, 0, it))
    out_shape = jax.ShapeDtypeStruct((B, C, T), x.dtype)

    return pl.pallas_call(
        _affine_rev_kernel,
        out_shape=out_shape,
        grid_spec=pltpu.PrefetchScalarGridSpec(
            num_scalar_prefetch=0,
            grid=(nb, nt),
            in_specs=in_specs,
            out_specs=out_specs,
        ),
        compiler_params=pltpu.CompilerParams(
            dimension_semantics=("parallel", "parallel")),
    )(x, x_mask, m32, inv_scale)


# ----------------------------- pure-JAX reference ----------------------------------

def elementwise_affine_reference(x, x_mask, m, logs):
    y = (m[None] + jnp.exp(logs)[None] * x) * x_mask
    logdet = jnp.sum(logs[None] * x_mask, axis=(1, 2))
    return y, logdet


# ----------------------------- test ------------------------------------------------

if __name__ == "__main__":
    key = jax.random.PRNGKey(0)
    km, kl, kx1, kx2 = jax.random.split(key, 4)

    # ---- case 1: tiny fp32 problem (exactness + reverse round-trip) ----------------
    B, C, T = 2, 4, 16
    x = jax.random.normal(kx1, (B, C, T), jnp.float32)
    lengths = jnp.array([T, T - 4], jnp.int32)
    x_mask = (jnp.arange(T)[None, :] < lengths[:, None]).astype(jnp.float32)[:, None, :]
    m = 0.3 * jax.random.normal(km, (C, 1), jnp.float32)
    logs = 0.2 * jax.random.normal(kl, (C, 1), jnp.float32)

    y, logdet = elementwise_affine_forward(x, x_mask, m, logs)
    jax.block_until_ready((y, logdet))
    y_ref, ld_ref = elementwise_affine_reference(x, x_mask, m, logs)
    assert y.shape == (B, C, T) and logdet.shape == (B,)
    assert bool(jnp.all(jnp.isfinite(y))) and bool(jnp.all(jnp.isfinite(logdet)))
    assert bool(jnp.allclose(y, y_ref, atol=1e-5, rtol=1e-5))
    assert bool(jnp.allclose(logdet, ld_ref, atol=1e-5, rtol=1e-5))

    x_rec = elementwise_affine_reverse(y, x_mask, m, logs)
    jax.block_until_ready(x_rec)
    assert bool(jnp.allclose(x_rec, x * x_mask, atol=1e-5, rtol=1e-5))

    # ---- case 2: VITS-like bf16 activations, ragged T (exercises native-dtype I/O,
    #              the T-tiling grid axis and the overhang guard) ---------------------
    B2, C2, T2 = 2, 2, 600
    m2 = 0.3 * jax.random.normal(km, (C2, 1), jnp.float32)
    logs2 = 0.2 * jax.random.normal(kl, (C2, 1), jnp.float32)
    x2 = jax.random.normal(kx2, (B2, C2, T2), jnp.float32).astype(jnp.bfloat16)
    lengths2 = jnp.array([T2, 450], jnp.int32)
    mask2 = (jnp.arange(T2)[None, :] < lengths2[:, None]).astype(jnp.float32)[:, None, :]

    y2, logdet2 = elementwise_affine_forward(x2, mask2, m2, logs2)
    jax.block_until_ready((y2, logdet2))
    assert y2.dtype == jnp.bfloat16 and y2.shape == (B2, C2, T2) and logdet2.shape == (B2,)
    y2_ref, ld2_ref = elementwise_affine_reference(x2.astype(jnp.float32), mask2, m2, logs2)
    assert bool(jnp.allclose(y2.astype(jnp.float32), y2_ref, atol=5e-2, rtol=5e-2))
    assert bool(jnp.allclose(logdet2, ld2_ref, atol=1e-3, rtol=1e-4))

    x2_rec = elementwise_affine_reverse(y2, mask2, m2, logs2)
    jax.block_until_ready(x2_rec)
    assert bool(jnp.allclose(x2_rec.astype(jnp.float32),
                             x2.astype(jnp.float32) * mask2, atol=5e-2, rtol=5e-2))

    print("KERNEL_OK")
</pallas_src>

<mosaic_0001>
module attributes {stable_mosaic.version = 11 : i64} {
  func.func @_affine_fwd_kernel(%arg0: i32, %arg1: i32, %arg2: memref<2x4x16xf32, #tpu.memory_space<vmem>>, %arg3: memref<2x1x16xf32, #tpu.memory_space<vmem>>, %arg4: memref<4x1xf32, #tpu.memory_space<vmem>>, %arg5: memref<4x1xf32, #tpu.memory_space<vmem>>, %arg6: memref<1xf32, #tpu.memory_space<smem>>, %arg7: memref<2x4x16xf32, #tpu.memory_space<vmem>>, %arg8: memref<2x128xf32, #tpu.memory_space<vmem>>) attributes {dimension_semantics = [#tpu.dimension_semantics<parallel>, #tpu.dimension_semantics<parallel>], iteration_bounds = array<i64: 1, 1>, scalar_prefetch = 0 : i64, scratch_operands = 0 : i64, tpu.core_type = #tpu.core_type<tc>, window_params = [{transform_indices = @transform_0, window_bounds = array<i64: 2, 4, 16>}, {transform_indices = @transform_1, window_bounds = array<i64: 2, 1, 16>}, {pipeline_mode = #tpu.pipeline_mode<synchronous>, transform_indices = @transform_2, window_bounds = array<i64: 4, 1>}, {pipeline_mode = #tpu.pipeline_mode<synchronous>, transform_indices = @transform_3, window_bounds = array<i64: 4, 1>}, {transform_indices = @transform_4, window_bounds = array<i64: 1>}, {transform_indices = @transform_5, window_bounds = array<i64: 2, 4, 16>}, {transform_indices = @transform_6, window_bounds = array<i64: 2, 128>}]} {
    %c0 = arith.constant 0 : index
    %c0_0 = arith.constant 0 : index
    %c0_1 = arith.constant 0 : index
    %0 = vector.load %arg2[%c0, %c0_0, %c0_1] : memref<2x4x16xf32, #tpu.memory_space<vmem>>, vector<2x4x16xf32>
    %c0_2 = arith.constant 0 : index
    %c0_3 = arith.constant 0 : index
    %c0_4 = arith.constant 0 : index
    %1 = vector.load %arg3[%c0_2, %c0_3, %c0_4] : memref<2x1x16xf32, #tpu.memory_space<vmem>>, vector<2x1x16xf32>
    %c0_5 = arith.constant 0 : index
    %c0_6 = arith.constant 0 : index
    %2 = vector.load %arg4[%c0_5, %c0_6] : memref<4x1xf32, #tpu.memory_space<vmem>>, vector<4x1xf32>
    %c0_7 = arith.constant 0 : index
    %c0_8 = arith.constant 0 : index
    %3 = vector.load %arg5[%c0_7, %c0_8] : memref<4x1xf32, #tpu.memory_space<vmem>>, vector<4x1xf32>
    %4 = vector.shape_cast %2 : vector<4x1xf32> to vector<1x4x1xf32>
    %5 = vector.shape_cast %3 : vector<4x1xf32> to vector<1x4x1xf32>
    %6 = vector.broadcast %5 : vector<1x4x1xf32> to vector<2x4x16xf32>
    %7 = arith.mulf %6, %0 : vector<2x4x16xf32>
    %8 = vector.broadcast %4 : vector<1x4x1xf32> to vector<2x4x16xf32>
    %9 = arith.addf %8, %7 : vector<2x4x16xf32>
    %10 = vector.broadcast %1 : vector<2x1x16xf32> to vector<2x4x16xf32>
    %11 = arith.mulf %9, %10 : vector<2x4x16xf32>
    %c0_9 = arith.constant 0 : index
    %c0_10 = arith.constant 0 : index
    %c0_11 = arith.constant 0 : index
    %12 = vector.load %arg7[%c0_9, %c0_10, %c0_11] : memref<2x4x16xf32, #tpu.memory_space<vmem>>, vector<2x4x16xf32>
    tpu.vector_store %arg7[%c0_9, %c0_10, %c0_11], %11 {strides = array<i32>} : memref<2x4x16xf32, #tpu.memory_space<vmem>>, vector<2x4x16xf32>,
    %13 = vector.shape_cast %1 : vector<2x1x16xf32> to vector<2x16xf32>
    %cst = arith.constant dense<0.000000e+00> : vector<2xf32>
    %14 = vector.multi_reduction <add>, %13, %cst [1] : vector<2x16xf32> to vector<2xf32>
    %15 = vector.shape_cast %14 : vector<2xf32> to vector<2x1xf32>
    %c0_12 = arith.constant 0 : index
    %16 = memref.load %arg6[%c0_12] : memref<1xf32, #tpu.memory_space<smem>>
    %17 = vector.broadcast %16 : f32 to vector<2x1xf32>
    %18 = arith.mulf %17, %15 : vector<2x1xf32>
    %19 = vector.shape_cast %18 : vector<2x1xf32> to vector<2x1xf32>
    %20 = vector.broadcast %19 : vector<2x1xf32> to vector<2x128xf32>
    %c0_13 = arith.constant 0 : index
    %c0_14 = arith.constant 0 : index
    %21 = vector.load %arg8[%c0_13, %c0_14] : memref<2x128xf32, #tpu.memory_space<vmem>>, vector<2x128xf32>
    tpu.vector_store %arg8[%c0_13, %c0_14], %20 {strides = array<i32>} : memref<2x128xf32, #tpu.memory_space<vmem>>, vector<2x128xf32>,
    return
  }
  func.func @transform_0(%arg0: i32, %arg1: i32) -> (i32, i32, i32) {
    %c0_i32 = arith.constant 0 : i32
    %c0_i32_0 = arith.constant 0 : i32
    return %arg0, %c0_i32, %arg1 : i32, i32, i32
  }
  func.func @transform_1(%arg0: i32, %arg1: i32) -> (i32, i32, i32) {
    %c0_i32 = arith.constant 0 : i32
    %c0_i32_0 = arith.constant 0 : i32
    return %arg0, %c0_i32, %arg1 : i32, i32, i32
  }
  func.func @transform_2(%arg0: i32, %arg1: i32) -> (i32, i32) {
    %c0_i32 = arith.constant 0 : i32
    %c0_i32_0 = arith.constant 0 : i32
    %c0_i32_1 = arith.constant 0 : i32
    return %c0_i32, %c0_i32_0 : i32, i32
  }
  func.func @transform_3(%arg0: i32, %arg1: i32) -> (i32, i32) {
    %c0_i32 = arith.constant 0 : i32
    %c0_i32_0 = arith.constant 0 : i32
    %c0_i32_1 = arith.constant 0 : i32
    return %c0_i32, %c0_i32_0 : i32, i32
  }
  func.func @transform_4(%arg0: i32, %arg1: i32) -> i32 {
    %c0_i32 = arith.constant 0 : i32
    %c0_i32_0 = arith.constant 0 : i32
    return %c0_i32 : i32
  }
  func.func @transform_5(%arg0: i32, %arg1: i32) -> (i32, i32, i32) {
    %c0_i32 = arith.constant 0 : i32
    %c0_i32_0 = arith.constant 0 : i32
    return %arg0, %c0_i32, %arg1 : i32, i32, i32
  }
  func.func @transform_6(%arg0: i32, %arg1: i32) -> (i32, i32) {
    %c0_i32 = arith.constant 0 : i32
    return %arg0, %arg1 : i32, i32
  }
}

</mosaic_0001>

<llo_original>
// kernel: tpu_custom_call.1
$region0: #{tpu_custom_call.1}
  #allocation0 [shape = 'u32[]', space=smem, size = 0x4, offset = 0x4, fixed_abs, tag = 'smem constant byte address 0x4 - core index']
  #allocation1 [shape = 'u32[144,128]{1,0:T(1,128)}', space=vmem, size = 0x12000, scoped, tag = 'internal scratch']
  #allocation2 [shape = 'f32[1]{0:T(128)S(6)}', space=smem, size = 0x200, scoped, tag = 'scoped memory for tpu_custom_call.1']
  %s0 = inlined_call_operand.vmem [shape: f32[2,4,16], index: 0, kind: input, shape index: {}]
  %s1 = inlined_call_operand.vmem [shape: f32[2,1,16], index: 1, kind: input, shape index: {}]
  %s2 = inlined_call_operand.vmem [shape: f32[4,1], index: 2, kind: input, shape index: {}]
  %s3 = inlined_call_operand.vmem [shape: f32[4,1], index: 3, kind: input, shape index: {}]
  %s4 = inlined_call_operand.<no memory space> [shape: f32[1], index: 4, kind: input, shape index: {}]
  %s5 = inlined_call_operand.hbm [shape: f32[2,4,16], index: 5, kind: output, shape index: {0}]
  %s6 = inlined_call_operand.hbm [shape: f32[2,128], index: 6, kind: output, shape index: {1}]
  %7 = xla_tuple %s5, %s6
  %s8 = sld [smem:[#allocation0]]
  $region38: #{tpu_custom_call.1} parent=0
    _
  %s10 = ssub.s32 1, %s8
  %s11 = scalar_select 0, %s10, %s8
  %12 = sst [smem:[#allocation2]] %s4
  $region1: #{tpu_custom_call.1} parent=0
    #allocation3 [shape = 'u8[4096]{0}', space=vmem, size = 0x1000, scoped, tag = 'output window, operand 0, single buffered']
    #allocation4 [shape = 's32[1]{0}', space=sflag, size = 0x4, scoped, tag = 'scoped memory for tpu_custom_call.1']
    #allocation5 [shape = 'u8[1024]{0}', space=vmem, size = 0x400, scoped, tag = 'output window, operand 1, single buffered']
    #allocation6 [shape = 's32[1]{0}', space=sflag, size = 0x4, scoped, tag = 'scoped memory for tpu_custom_call.1']
    %13 = vsyncpa [#allocation4], 0
    %14 = vsyncpa [#allocation6], 0
    // Predicated region
    $region2: #{tpu_custom_call.1} parent=1 // pred_check
      _
    $region3: #{tpu_custom_call.1} parent=1 // pred_check_branch
      %16 = sbr.rel (0) target = $region5
    $region4: #{tpu_custom_call.1} parent=1 // pred_region
      _
    $region5: #{tpu_custom_call.1} parent=1 // pred_fallthru
      _
    // Predicated region
    $region6: #{tpu_custom_call.1} parent=1 // pred_check
      _
    $region7: #{tpu_custom_call.1} parent=1 // pred_check_branch
      %18 = sbr.rel (0) target = $region9
    $region8: #{tpu_custom_call.1} parent=1 // pred_region
      _
    $region9: #{tpu_custom_call.1} parent=1 // pred_fallthru
      _
    // Predicated region
    $region10: #{tpu_custom_call.1} parent=1 // pred_check
      _
    $region11: #{tpu_custom_call.1} parent=1 // pred_check_branch
      %20 = sbr.rel (0) target = $region13
    $region12: #{tpu_custom_call.1} parent=1 // pred_region
      _
    $region13: #{tpu_custom_call.1} parent=1 // pred_fallthru
      _
    // Predicated region
    $region14: #{tpu_custom_call.1} parent=1 // pred_check
      _
    $region15: #{tpu_custom_call.1} parent=1 // pred_check_branch
      %22 = sbr.rel (0) target = $region17
    $region16: #{tpu_custom_call.1} parent=1 // pred_region
      _
    $region17: #{tpu_custom_call.1} parent=1 // pred_fallthru
      _
    // Predicated region
    $region18: #{tpu_custom_call.1} parent=1 // pred_check
      _
    $region19: #{tpu_custom_call.1} parent=1 // pred_check_branch
      %24 = sbr.rel (0) target = $region21
    $region20: #{tpu_custom_call.1} parent=1 // pred_region
      _
    $region21: #{tpu_custom_call.1} parent=1 // pred_fallthru
      _
    %v25 = vld [vmem:[%s0] sm:$0xf]
    %v26 = vld [vmem:[%s0 + $0x4] sm:$0xf]
    %v27 = vld [vmem:[%s1] sm:$0x1]
    %v28 = vld [vmem:[%s1 + $0x1] sm:$0x1]
    %v29 = vld [vmem:[%s2] sm:$0xf]
    %v30 = vld [vmem:[%s3] sm:$0xf]
    %32 = vset.pattern.permute.xlu0 0
    %33 = vperm.xlu0 %32, %v30
    %v34 = vpop.permute.xlu0 %33
    %v36 = vmul.f32 %v34, %v25
    %v37 = vmul.f32 %v34, %v26
    %39 = vset.pattern.permute.xlu0 0
    %40 = vperm.xlu0 %39, %v29
    %v41 = vpop.permute.xlu0 %40
    %v43 = vadd.f32 %v41, %v36
    %v44 = vadd.f32 %v41, %v37
    %v47 = vlaneseq
    %v48 = vshrl.u32 %v47, 7
    %v49 = vsub.s32 0, %v48
    %v50 = vrot.slane %v27, %v49
    %v51 = vlaneseq
    %v52 = vshrl.u32 %v51, 7
    %v53 = vsub.s32 0, %v52
    %v54 = vrot.slane %v28, %v53
    %v57 = vmul.f32 %v43, %v50
    %v58 = vmul.f32 %v44, %v54
    %vm59 = vcmask 125952
    %60 = vst.msk [vmem:[#allocation3] sm:$0xf] %vm59, %v57
    %61 = vst.msk [vmem:[#allocation3 + $0x4] sm:$0xf] %vm59, %v58
    %v62 = vcombine.low %v27, %v28
    %v64 = vunpack.c.l.s4 1966171168
    %v65 = vunpack.c.0.s8 %v64
    %v66 = vlaneseq
    %v67 = vshrl.u32 %v66, 7
    %v68 = vsub.s32 %v65, %v67
    %v69 = vrot.slane %v62, %v68
    %v71 = vunpack.c.l.s4 1966171168
    %v72 = vunpack.c.0.s8 %v71
    %v73 = vlaneseq
    %v74 = vshrl.u32 %v73, 7
    %v75 = vsub.s32 %v72, %v74
    %v76 = vrot.slane %v69, %v75
    %vm78 = vcmask 123904
    %v79 = vsel %vm78, %v76, 0.0
    %80 = vadd.xlane.f32.xlu0 %v79
    %v81 = vpop.xlane.xlu0 %80
    %s82 = sld [smem:[#allocation2]]
    %v83 = vstv %s82
    %v84 = vmul.f32 %v83, %v81
    %85 = vst [vmem:[#allocation5] sm:$0x3] %v84
    // Predicated region
    $region22: #{tpu_custom_call.1} parent=1 // pred_check
      _
    $region23: #{tpu_custom_call.1} parent=1 // pred_check_branch
      %87 = sbr.rel (0) target = $region25
    $region24: #{tpu_custom_call.1} parent=1 // pred_region
      %s89 = ssub.s32 128, 128
      %90 = vsyncadd [#allocation4], %s89
      %s91 = sshll.u32 [#allocation3], 4
      %s92 = int_to_ptr.vmem [resolvable:$true] %s91
      %97 = dma.vmem_to_hbm [thread:$0]  %s92, 128, %s5, [#allocation4], 64, 64, 4
    $region25: #{tpu_custom_call.1} parent=1 // pred_fallthru
      _
    // Predicated region
    $region26: #{tpu_custom_call.1} parent=1 // pred_check
      _
    $region27: #{tpu_custom_call.1} parent=1 // pred_check_branch
      %99 = sbr.rel (0) target = $region29
    $region28: #{tpu_custom_call.1} parent=1 // pred_region
      %s101 = ssub.s32 32, 32
      %102 = vsyncadd [#allocation6], %s101
      %s104 = sshll.u32 [#allocation5], 4
      %s105 = int_to_ptr.vmem [resolvable:$true] %s104
      %107 = dma.vmem_to_hbm [thread:$0]  %s105, 32, %s6, [#allocation6]
    $region29: #{tpu_custom_call.1} parent=1 // pred_fallthru
      _
    // Predicated region
    $region30: #{tpu_custom_call.1} parent=1 // pred_check
      _
    $region31: #{tpu_custom_call.1} parent=1 // pred_check_branch
      %109 = sbr.rel (0) target = $region33
    $region32: #{tpu_custom_call.1} parent=1 // pred_region
      %110 = dma.done [#allocation4], 128
    $region33: #{tpu_custom_call.1} parent=1 // pred_fallthru
      _
    // Predicated region
    $region34: #{tpu_custom_call.1} parent=1 // pred_check
      _
    $region35: #{tpu_custom_call.1} parent=1 // pred_check_branch
      %112 = sbr.rel (0) target = $region37
    $region36: #{tpu_custom_call.1} parent=1 // pred_region
      %113 = dma.done [#allocation6], 32
    $region37: #{tpu_custom_call.1} parent=1 // pred_fallthru
      _
    %114 = vsyncpa [#allocation4], 1
    %115 = vsyncpa [#allocation6], 1

</llo_original>
